<compile_context>
chip_gen: v6e
topology: v6e:2x2x1
jax: 0.10.0
libtpu: 0.0.40
codegen_flags: <defaults>
</compile_context>

<pallas_src>
import functools

import jax
import jax.numpy as jnp
from jax.experimental import pallas as pl
from jax.experimental.pallas import tpu as pltpu


# ------------------------------- helpers ----------------------------------- #

def _round_up(x, m):
    return ((x + m - 1) // m) * m


def _cdiv(a, b):
    return -(-a // b)


_ACTIVATIONS = {
    "ReLU": lambda v: jnp.maximum(v, 0.0),
    "Tanh": jnp.tanh,
    "Sigmoid": jax.nn.sigmoid,
    "ELU": jax.nn.elu,
    "LeakyReLU": lambda v: jnp.where(v >= 0, v, 0.01 * v),
    "GELU": jax.nn.gelu,
    "Softplus": jax.nn.softplus,
    "Identity": lambda v: v,
}


def _get_activation(name):
    if name not in _ACTIVATIONS:
        raise ValueError(f"unsupported activation: {name}")
    return _ACTIVATIONS[name]


def _running_on_v7x():
    """Best-effort chip detection; defaults to False (no forced grid split)."""
    try:
        kind = jax.devices()[0].device_kind.lower()
    except Exception:
        return False
    return ("v7" in kind) or ("7x" in kind)


# ----------------------------- Pallas kernel ------------------------------- #

def _critic_mlp_kernel(s_ref, a_ref, w1s_ref, w1a_ref, b1_ref,
                       w2_ref, b2_ref, w3_ref, b3_ref, o_ref, *, activation):
    """One batch tile of the fused 3-layer MLP (concat folded into layer 1)."""
    mm_dt = w1s_ref.dtype   # optional bf16 MXU operands; cast happens in-kernel

    # Layer 1: the torch.cat is folded into two matmuls (no HBM concat pass).
    h = (jnp.dot(s_ref[...].astype(mm_dt), w1s_ref[...],
                 preferred_element_type=jnp.float32)
         + jnp.dot(a_ref[...].astype(mm_dt), w1a_ref[...],
                   preferred_element_type=jnp.float32)
         + b1_ref[...])
    h = activation(h)                                   # f32 VPU/EUP math

    # Layer 2.
    h = (jnp.dot(h.astype(w2_ref.dtype), w2_ref[...],
                 preferred_element_type=jnp.float32)
         + b2_ref[...])
    h = activation(h)

    # Layer 3 (out_features == 1), lane-dense:
    #   out[r, j] = sum_k w3_rows[r, k] * h[j, k]
    # w3_rows holds 8 identical copies of w3 (layout-friendly NT matmul lhs);
    # row 0 is kept.  This produces a (1, tile) row directly, so the store is
    # an unmasked full-lane vst instead of a masked (tile, 1) column.
    out = jax.lax.dot_general(
        w3_ref[...], h,
        dimension_numbers=(((1,), (1,)), ((), ())),
        preferred_element_type=jnp.float32)
    o_ref[...] = (out[0:1, :] + b3_ref[...]).astype(o_ref.dtype)


# ------------------------------ host wrapper -------------------------------- #

def critic_forward(state, action, params, *, activation="ReLU",
                   batch_tile=4096, matmul_dtype=None):
    """Pallas implementation of Critic.forward(state, action) -> (B, 1)."""
    w1, b1, w2, b2, w3, b3 = params

    B, state_dim = state.shape
    action_dim = action.shape[1]
    D_in = state_dim + action_dim
    H1 = w1.shape[1]
    H2 = w2.shape[1]
    D_out = w3.shape[1]
    assert w1.shape[0] == D_in, "W1 rows must equal state_dim + action_dim"
    assert D_out == 1, "Critic emits a single scalar value per row"

    mm_dt = jnp.dtype(matmul_dtype) if matmul_dtype is not None else jnp.dtype(jnp.float32)

    # Fold the concat into the first layer: W1 = [W1_state ; W1_action].
    # Only the (tiny) weights are pre-cast; the streamed activations are cast
    # inside the kernel so input HBM traffic is unchanged.
    w1s = w1[:state_dim].astype(mm_dt)
    w1a = w1[state_dim:].astype(mm_dt)
    w2c = w2.astype(mm_dt)
    w3_rows = jnp.tile(w3.reshape(1, H2).astype(jnp.float32), (8, 1))
    b1c = b1.reshape(1, H1).astype(jnp.float32)
    b2c = b2.reshape(1, H2).astype(jnp.float32)
    b3c = b3.reshape(1, 1).astype(jnp.float32)

    # ---- batch tiling ------------------------------------------------------
    # Ragged batches are handled in-kernel (the last grid step reads past the
    # end of state/action; garbage rows are sliced off the output), so no
    # wrapper-side jnp.pad pass over the hot inputs is needed.
    tile = max(8, min(int(batch_tile), _round_up(B, 8)))
    tile = _round_up(tile, 8)
    if tile < B:
        # Multi-step grid: keep the lane-dense output block a multiple of 128.
        tile = _round_up(tile, 128)
    # v7x only (2 TensorCores/chip): split into >= 2 grid steps when each half
    # still has enough rows (>= 2048) to amortise per-step overhead.
    if _running_on_v7x() and tile >= B and B >= 4096:
        tile = _round_up(_cdiv(B, 2), 128)
    grid_n = _cdiv(B, tile)
    B_pad = grid_n * tile

    act_fn = _get_activation(activation)
    kernel = functools.partial(_critic_mlp_kernel, activation=act_fn)

    full = lambda shape: pl.BlockSpec(shape, lambda i: (0, 0))

    in_bytes = state.dtype.itemsize
    n_transc = 0 if activation == "ReLU" else B_pad * (H1 + H2)
    cost = pl.CostEstimate(
        flops=2 * B_pad * (D_in * H1 + H1 * H2 + H2 * D_out),
        transcendentals=n_transc,
        bytes_accessed=(B * D_in * in_bytes                       # streamed inputs
                        + B * 4                                   # output row
                        + (D_in * H1 + H1 * H2) * mm_dt.itemsize  # big weights
                        + (H1 + H2 + 8 * H2 + 1) * 4),            # biases + w3 rows
    )

    out_row = pl.pallas_call(
        kernel,
        out_shape=jax.ShapeDtypeStruct((1, B_pad), jnp.float32),
        grid_spec=pltpu.PrefetchScalarGridSpec(
            num_scalar_prefetch=0,
            grid=(grid_n,),
            in_specs=[
                pl.BlockSpec((tile, state_dim), lambda i: (i, 0)),
                pl.BlockSpec((tile, action_dim), lambda i: (i, 0)),
                full((state_dim, H1)),
                full((action_dim, H1)),
                full((1, H1)),
                full((H1, H2)),
                full((1, H2)),
                full((8, H2)),            # W3 replicated rows (NT matmul lhs)
                full((1, 1)),
            ],
            out_specs=pl.BlockSpec((1, tile), lambda i: (0, i)),
        ),
        compiler_params=pltpu.CompilerParams(
            dimension_semantics=("parallel",)),
        cost_estimate=cost,
    )(state, action, w1s, w1a, b1c, w2c, b2c, w3_rows, b3c)

    # Lane-dense (1, B_pad) row -> (B, 1); contiguous reshape + slice (cheap).
    return out_row.reshape(B_pad, 1)[:B]


# --------------------------- parameter creation ----------------------------- #

def init_critic_params(key, state_dim, action_dim, hidden_sizes, out_dim=1):
    """Deterministic init mimicking torch.nn.Linear's U(-1/sqrt(fan_in), +)."""
    dims = [state_dim + action_dim] + list(hidden_sizes) + [out_dim]
    params = []
    for d_in, d_out in zip(dims[:-1], dims[1:]):
        key, kw, kb = jax.random.split(key, 3)
        bound = 1.0 / jnp.sqrt(d_in)
        w = jax.random.uniform(kw, (d_in, d_out), jnp.float32, -bound, bound)
        b = jax.random.uniform(kb, (1, d_out), jnp.float32, -bound, bound)
        params.extend([w, b])
    return tuple(params)


def critic_reference(state, action, params, *, activation="ReLU"):
    """Plain-JAX reference of the same forward pass (for sanity checking)."""
    act_fn = _get_activation(activation)
    x = jnp.concatenate([state, action], axis=-1)
    w1, b1, w2, b2, w3, b3 = params
    h = act_fn(x @ w1 + b1)
    h = act_fn(h @ w2 + b2)
    return h @ w3 + b3


# ---------------------------------- main ------------------------------------ #

if __name__ == "__main__":
    # Small shapes consistent with the module:
    # Critic(state_dim=16, action_dim=8, hidden_sizes=(32, 32), activation="ReLU")
    state_dim = 16
    action_dim = 8
    hidden_sizes = (32, 32)
    activation = "ReLU"

    key = jax.random.PRNGKey(0)
    k_state, k_action, k_params = jax.random.split(key, 3)
    params = init_critic_params(k_params, state_dim, action_dim, hidden_sizes)

    # 1) Tile-aligned small batch (single grid step).
    batch = 8
    state = jax.random.normal(k_state, (batch, state_dim), jnp.float32)
    action = jax.random.normal(k_action, (batch, action_dim), jnp.float32)
    out = jax.block_until_ready(critic_forward(state, action, params,
                                               activation=activation))
    ref = critic_reference(state, action, params, activation=activation)
    assert out.shape == (batch, 1)
    assert jnp.allclose(out, ref, atol=1e-4, rtol=1e-4)

    # 2) Ragged batch (exercises the in-kernel tail handling, single step).
    batch_r = 10
    k_state2, k_action2 = jax.random.split(k_state)
    state_r = jax.random.normal(k_state2, (batch_r, state_dim), jnp.float32)
    action_r = jax.random.normal(k_action2, (batch_r, action_dim), jnp.float32)
    out_r = jax.block_until_ready(critic_forward(state_r, action_r, params,
                                                 activation=activation))
    ref_r = critic_reference(state_r, action_r, params, activation=activation)
    assert out_r.shape == (batch_r, 1)
    assert jnp.allclose(out_r, ref_r, atol=1e-4, rtol=1e-4)

    # 3) Multi-step grid with a ragged tail (lane-dense 128-multiple tiles).
    batch_m = 300
    k_state3, k_action3 = jax.random.split(k_action)
    state_m = jax.random.normal(k_state3, (batch_m, state_dim), jnp.float32)
    action_m = jax.random.normal(k_action3, (batch_m, action_dim), jnp.float32)
    out_m = jax.block_until_ready(critic_forward(state_m, action_m, params,
                                                 activation=activation,
                                                 batch_tile=128))
    ref_m = critic_reference(state_m, action_m, params, activation=activation)
    assert out_m.shape == (batch_m, 1)
    assert jnp.allclose(out_m, ref_m, atol=1e-4, rtol=1e-4)

    print("KERNEL_OK")
</pallas_src>

<mosaic_0001>
module attributes {stable_mosaic.version = 11 : i64} {
  func.func @_critic_mlp_kernel(%arg0: i32, %arg1: memref<8x16xf32, #tpu.memory_space<vmem>>, %arg2: memref<8x8xf32, #tpu.memory_space<vmem>>, %arg3: memref<16x32xf32, #tpu.memory_space<vmem>>, %arg4: memref<8x32xf32, #tpu.memory_space<vmem>>, %arg5: memref<1x32xf32, #tpu.memory_space<vmem>>, %arg6: memref<32x32xf32, #tpu.memory_space<vmem>>, %arg7: memref<1x32xf32, #tpu.memory_space<vmem>>, %arg8: memref<8x32xf32, #tpu.memory_space<vmem>>, %arg9: memref<1x1xf32, #tpu.memory_space<vmem>>, %arg10: memref<1x8xf32, #tpu.memory_space<vmem>>) attributes {dimension_semantics = [#tpu.dimension_semantics<parallel>], iteration_bounds = array<i64: 1>, scalar_prefetch = 0 : i64, scratch_operands = 0 : i64, tpu.core_type = #tpu.core_type<tc>, window_params = [{transform_indices = @transform_0, window_bounds = array<i64: 8, 16>}, {transform_indices = @transform_1, window_bounds = array<i64: 8, 8>}, {pipeline_mode = #tpu.pipeline_mode<synchronous>, transform_indices = @transform_2, window_bounds = array<i64: 16, 32>}, {pipeline_mode = #tpu.pipeline_mode<synchronous>, transform_indices = @transform_3, window_bounds = array<i64: 8, 32>}, {pipeline_mode = #tpu.pipeline_mode<synchronous>, transform_indices = @transform_4, window_bounds = array<i64: 1, 32>}, {pipeline_mode = #tpu.pipeline_mode<synchronous>, transform_indices = @transform_5, window_bounds = array<i64: 32, 32>}, {pipeline_mode = #tpu.pipeline_mode<synchronous>, transform_indices = @transform_6, window_bounds = array<i64: 1, 32>}, {pipeline_mode = #tpu.pipeline_mode<synchronous>, transform_indices = @transform_7, window_bounds = array<i64: 8, 32>}, {pipeline_mode = #tpu.pipeline_mode<synchronous>, transform_indices = @transform_8, window_bounds = array<i64: 1, 1>}, {transform_indices = @transform_9, window_bounds = array<i64: 1, 8>}]} {
    %c0 = arith.constant 0 : index
    %c0_0 = arith.constant 0 : index
    %0 = vector.load %arg1[%c0, %c0_0] : memref<8x16xf32, #tpu.memory_space<vmem>>, vector<8x16xf32>
    %c0_1 = arith.constant 0 : index
    %c0_2 = arith.constant 0 : index
    %1 = vector.load %arg3[%c0_1, %c0_2] : memref<16x32xf32, #tpu.memory_space<vmem>>, vector<16x32xf32>
    %cst = arith.constant dense<0.000000e+00> : vector<8x32xf32>
    %2 = tpu.matmul %0, %1, %cst {dimension_numbers = #tpu.dot_dimension_numbers<[1], [0], [0], [1], [0, 0, 1, 1], [], []>} : vector<8x16xf32>, vector<16x32xf32>, vector<8x32xf32> -> vector<8x32xf32>
    %c0_3 = arith.constant 0 : index
    %c0_4 = arith.constant 0 : index
    %3 = vector.load %arg2[%c0_3, %c0_4] : memref<8x8xf32, #tpu.memory_space<vmem>>, vector<8x8xf32>
    %c0_5 = arith.constant 0 : index
    %c0_6 = arith.constant 0 : index
    %4 = vector.load %arg4[%c0_5, %c0_6] : memref<8x32xf32, #tpu.memory_space<vmem>>, vector<8x32xf32>
    %cst_7 = arith.constant dense<0.000000e+00> : vector<8x32xf32>
    %5 = tpu.matmul %3, %4, %cst_7 {dimension_numbers = #tpu.dot_dimension_numbers<[1], [0], [0], [1], [0, 0, 1, 1], [], []>} : vector<8x8xf32>, vector<8x32xf32>, vector<8x32xf32> -> vector<8x32xf32>
    %6 = arith.addf %2, %5 : vector<8x32xf32>
    %c0_8 = arith.constant 0 : index
    %c0_9 = arith.constant 0 : index
    %7 = vector.load %arg5[%c0_8, %c0_9] : memref<1x32xf32, #tpu.memory_space<vmem>>, vector<1x32xf32>
    %8 = vector.broadcast %7 : vector<1x32xf32> to vector<8x32xf32>
    %9 = arith.addf %6, %8 : vector<8x32xf32>
    %cst_10 = arith.constant 0.000000e+00 : f32
    %10 = vector.broadcast %cst_10 : f32 to vector<8x32xf32>
    %11 = arith.maximumf %9, %10 : vector<8x32xf32>
    %c0_11 = arith.constant 0 : index
    %c0_12 = arith.constant 0 : index
    %12 = vector.load %arg6[%c0_11, %c0_12] : memref<32x32xf32, #tpu.memory_space<vmem>>, vector<32x32xf32>
    %cst_13 = arith.constant dense<0.000000e+00> : vector<8x32xf32>
    %13 = tpu.matmul %11, %12, %cst_13 {dimension_numbers = #tpu.dot_dimension_numbers<[1], [0], [0], [1], [0, 0, 1, 1], [], []>} : vector<8x32xf32>, vector<32x32xf32>, vector<8x32xf32> -> vector<8x32xf32>
    %c0_14 = arith.constant 0 : index
    %c0_15 = arith.constant 0 : index
    %14 = vector.load %arg7[%c0_14, %c0_15] : memref<1x32xf32, #tpu.memory_space<vmem>>, vector<1x32xf32>
    %15 = vector.broadcast %14 : vector<1x32xf32> to vector<8x32xf32>
    %16 = arith.addf %13, %15 : vector<8x32xf32>
    %cst_16 = arith.constant 0.000000e+00 : f32
    %17 = vector.broadcast %cst_16 : f32 to vector<8x32xf32>
    %18 = arith.maximumf %16, %17 : vector<8x32xf32>
    %c0_17 = arith.constant 0 : index
    %c0_18 = arith.constant 0 : index
    %19 = vector.load %arg8[%c0_17, %c0_18] : memref<8x32xf32, #tpu.memory_space<vmem>>, vector<8x32xf32>
    %cst_19 = arith.constant dense<0.000000e+00> : vector<8x8xf32>
    %20 = tpu.matmul %19, %18, %cst_19 {dimension_numbers = #tpu.dot_dimension_numbers<[1], [1], [0], [0], [0, 0, 1, 0], [], []>} : vector<8x32xf32>, vector<8x32xf32>, vector<8x8xf32> -> vector<8x8xf32>
    %21 = vector.extract_strided_slice %20 {offsets = [0, 0], sizes = [1, 8], strides = [1, 1]} : vector<8x8xf32> to vector<1x8xf32>
    %c0_20 = arith.constant 0 : index
    %c0_21 = arith.constant 0 : index
    %22 = vector.load %arg9[%c0_20, %c0_21] : memref<1x1xf32, #tpu.memory_space<vmem>>, vector<1x1xf32>
    %23 = vector.broadcast %22 : vector<1x1xf32> to vector<1x8xf32>
    %24 = arith.addf %21, %23 : vector<1x8xf32>
    %c0_22 = arith.constant 0 : index
    %c0_23 = arith.constant 0 : index
    %25 = vector.load %arg10[%c0_22, %c0_23] : memref<1x8xf32, #tpu.memory_space<vmem>>, vector<1x8xf32>
    tpu.vector_store %arg10[%c0_22, %c0_23], %24 {strides = array<i32>} : memref<1x8xf32, #tpu.memory_space<vmem>>, vector<1x8xf32>,
    return
  }
  func.func @transform_0(%arg0: i32) -> (i32, i32) {
    %c0_i32 = arith.constant 0 : i32
    %c0_i32_0 = arith.constant 0 : i32
    return %arg0, %c0_i32 : i32, i32
  }
  func.func @transform_1(%arg0: i32) -> (i32, i32) {
    %c0_i32 = arith.constant 0 : i32
    %c0_i32_0 = arith.constant 0 : i32
    return %arg0, %c0_i32 : i32, i32
  }
  func.func @transform_2(%arg0: i32) -> (i32, i32) {
    %c0_i32 = arith.constant 0 : i32
    %c0_i32_0 = arith.constant 0 : i32
    %c0_i32_1 = arith.constant 0 : i32
    return %c0_i32, %c0_i32_0 : i32, i32
  }
  func.func @transform_3(%arg0: i32) -> (i32, i32) {
    %c0_i32 = arith.constant 0 : i32
    %c0_i32_0 = arith.constant 0 : i32
    %c0_i32_1 = arith.constant 0 : i32
    return %c0_i32, %c0_i32_0 : i32, i32
  }
  func.func @transform_4(%arg0: i32) -> (i32, i32) {
    %c0_i32 = arith.constant 0 : i32
    %c0_i32_0 = arith.constant 0 : i32
    %c0_i32_1 = arith.constant 0 : i32
    return %c0_i32, %c0_i32_0 : i32, i32
  }
  func.func @transform_5(%arg0: i32) -> (i32, i32) {
    %c0_i32 = arith.constant 0 : i32
    %c0_i32_0 = arith.constant 0 : i32
    %c0_i32_1 = arith.constant 0 : i32
    return %c0_i32, %c0_i32_0 : i32, i32
  }
  func.func @transform_6(%arg0: i32) -> (i32, i32) {
    %c0_i32 = arith.constant 0 : i32
    %c0_i32_0 = arith.constant 0 : i32
    %c0_i32_1 = arith.constant 0 : i32
    return %c0_i32, %c0_i32_0 : i32, i32
  }
  func.func @transform_7(%arg0: i32) -> (i32, i32) {
    %c0_i32 = arith.constant 0 : i32
    %c0_i32_0 = arith.constant 0 : i32
    %c0_i32_1 = arith.constant 0 : i32
    return %c0_i32, %c0_i32_0 : i32, i32
  }
  func.func @transform_8(%arg0: i32) -> (i32, i32) {
    %c0_i32 = arith.constant 0 : i32
    %c0_i32_0 = arith.constant 0 : i32
    %c0_i32_1 = arith.constant 0 : i32
    return %c0_i32, %c0_i32_0 : i32, i32
  }
  func.func @transform_9(%arg0: i32) -> (i32, i32) {
    %c0_i32 = arith.constant 0 : i32
    %c0_i32_0 = arith.constant 0 : i32
    return %c0_i32, %arg0 : i32, i32
  }
}

</mosaic_0001>

<llo_original>
// kernel: tpu_custom_call.1
$region0: #{tpu_custom_call.1}
  #allocation0 [shape = 'u32[]', space=smem, size = 0x4, offset = 0x4, fixed_abs, tag = 'smem constant byte address 0x4 - core index']
  #allocation1 [shape = 'u32[144,128]{1,0:T(1,128)}', space=vmem, size = 0x12000, scoped, tag = 'internal scratch']
  #allocation2 [shape = 'f32[1,1]{1,0:T(1,128)S(1)}', space=vmem, size = 0x200, scoped, tag = 'scoped memory for tpu_custom_call.1']
  %s0 = inlined_call_operand.hbm [shape: f32[8,16], index: 0, kind: input, shape index: {}]
  %s1 = inlined_call_operand.hbm [shape: f32[8,8], index: 1, kind: input, shape index: {}]
  %s2 = inlined_call_operand.hbm [shape: f32[16,32], index: 2, kind: input, shape index: {}]
  %s3 = inlined_call_operand.hbm [shape: f32[8,32], index: 3, kind: input, shape index: {}]
  %s4 = inlined_call_operand.vmem [shape: f32[1,32], index: 4, kind: input, shape index: {}]
  %s5 = inlined_call_operand.hbm [shape: f32[32,32], index: 5, kind: input, shape index: {}]
  %s6 = inlined_call_operand.vmem [shape: f32[1,32], index: 6, kind: input, shape index: {}]
  %s7 = inlined_call_operand.vmem [shape: f32[8,32], index: 7, kind: input, shape index: {}]
  %s8 = inlined_call_operand.<no memory space> [shape: f32[1,1], index: 8, kind: input, shape index: {}]
  %s9 = inlined_call_operand.hbm [shape: f32[1,8], index: 9, kind: output, shape index: {}]
  %s10 = sld [smem:[#allocation0]]
  $region66: #{tpu_custom_call.1} parent=0
    _
  %s12 = ssub.s32 1, %s10
  %s13 = scalar_select 0, %s12, %s10
  %v14 = vstv %s8
  %15 = vst [vmem:[#allocation2] sm:$0x1] %v14
  $region1: #{tpu_custom_call.1} parent=0
    #allocation3 [shape = 'u8[4096]{0}', space=vmem, size = 0x1000, scoped, tag = 'input window, operand 0, single buffered']
    #allocation4 [shape = 's32[1]{0}', space=sflag, size = 0x4, scoped, tag = 'scoped memory for tpu_custom_call.1']
    #allocation5 [shape = 's32[1]{0}', space=sflag, size = 0x4, scoped, tag = 'scoped memory for tpu_custom_call.1']
    #allocation6 [shape = 'u8[4096]{0}', space=vmem, size = 0x1000, scoped, tag = 'input window, operand 1, single buffered']
    #allocation7 [shape = 's32[1]{0}', space=sflag, size = 0x4, scoped, tag = 'scoped memory for tpu_custom_call.1']
    #allocation8 [shape = 'u8[8192]{0}', space=vmem, size = 0x2000, scoped, tag = 'input window, operand 2, single buffered']
    #allocation9 [shape = 'u8[4096]{0}', space=vmem, size = 0x1000, scoped, tag = 'input window, operand 3, single buffered']
    #allocation10 [shape = 's32[1]{0}', space=sflag, size = 0x4, scoped, tag = 'scoped memory for tpu_custom_call.1']
    #allocation11 [shape = 'u8[16384]{0}', space=vmem, size = 0x4000, scoped, tag = 'input window, operand 5, single buffered']
    #allocation12 [shape = 'u8[512]{0}', space=vmem, size = 0x400, scoped, tag = 'output window, operand 0, single buffered']
    %16 = vsyncpa [#allocation4], 0
    %17 = vsyncpa [#allocation7], 0
    %18 = vsyncpa [#allocation10], 0
    %19 = vsyncpa [#allocation5], 0
    // Predicated region
    $region2: #{tpu_custom_call.1} parent=1 // pred_check
      _
    $region3: #{tpu_custom_call.1} parent=1 // pred_check_branch
      %21 = sbr.rel (0) target = $region5
    $region4: #{tpu_custom_call.1} parent=1 // pred_region
      %s23 = ssub.s32 128, 128
      %24 = vsyncadd [#allocation4], %s23
      %s26 = sshll.u32 [#allocation3], 4
      %s27 = int_to_ptr.vmem [resolvable:$true] %s26
      %29 = dma.hbm_to_vmem [thread:$0]  %s0, 128, %s27, [#allocation4]
    $region5: #{tpu_custom_call.1} parent=1 // pred_fallthru
      _
    // Predicated region
    $region6: #{tpu_custom_call.1} parent=1 // pred_check
      _
    $region7: #{tpu_custom_call.1} parent=1 // pred_check_branch
      %31 = sbr.rel (0) target = $region9
    $region8: #{tpu_custom_call.1} parent=1 // pred_region
      %s33 = ssub.s32 128, 128
      %34 = vsyncadd [#allocation7], %s33
      %s36 = sshll.u32 [#allocation6], 4
      %s37 = int_to_ptr.vmem [resolvable:$true] %s36
      %39 = dma.hbm_to_vmem [thread:$0]  %s1, 128, %s37, [#allocation7]
    $region9: #{tpu_custom_call.1} parent=1 // pred_fallthru
      _
    // Predicated region
    $region10: #{tpu_custom_call.1} parent=1 // pred_check
      _
    $region11: #{tpu_custom_call.1} parent=1 // pred_check_branch
      %41 = sbr.rel (0) target = $region13
    $region12: #{tpu_custom_call.1} parent=1 // pred_region
      %s43 = ssub.s32 256, 256
      %44 = vsyncadd [#allocation7], %s43
      %s45 = sshll.u32 [#allocation8], 4
      %s46 = int_to_ptr.vmem [resolvable:$true] %s45
      %51 = dma.hbm_to_vmem [thread:$0]  %s2, 256, %s46, [#allocation7], 128, 128, 8
    $region13: #{tpu_custom_call.1} parent=1 // pred_fallthru
      _
    // Predicated region
    $region14: #{tpu_custom_call.1} parent=1 // pred_check
      _
    $region15: #{tpu_custom_call.1} parent=1 // pred_check_branch
      %53 = sbr.rel (0) target = $region17
    $region16: #{tpu_custom_call.1} parent=1 // pred_region
      %s55 = ssub.s32 128, 128
      %56 = vsyncadd [#allocation10], %s55
      %s58 = sshll.u32 [#allocation9], 4
      %s59 = int_to_ptr.vmem [resolvable:$true] %s58
      %61 = dma.hbm_to_vmem [thread:$0]  %s3, 128, %s59, [#allocation10]
    $region17: #{tpu_custom_call.1} parent=1 // pred_fallthru
      _
    // Predicated region
    $region18: #{tpu_custom_call.1} parent=1 // pred_check
      _
    $region19: #{tpu_custom_call.1} parent=1 // pred_check_branch
      %63 = sbr.rel (0) target = $region21
    $region20: #{tpu_custom_call.1} parent=1 // pred_region
      _
    $region21: #{tpu_custom_call.1} parent=1 // pred_fallthru
      _
    // Predicated region
    $region22: #{tpu_custom_call.1} parent=1 // pred_check
      _
    $region23: #{tpu_custom_call.1} parent=1 // pred_check_branch
      %65 = sbr.rel (0) target = $region25
    $region24: #{tpu_custom_call.1} parent=1 // pred_region
      %s67 = ssub.s32 512, 512
      %68 = vsyncadd [#allocation10], %s67
      %s69 = sshll.u32 [#allocation11], 4
      %s70 = int_to_ptr.vmem [resolvable:$true] %s69
      %75 = dma.hbm_to_vmem [thread:$0]  %s5, 512, %s70, [#allocation10], 128, 128, 8
    $region25: #{tpu_custom_call.1} parent=1 // pred_fallthru
      _
    // Predicated region
    $region26: #{tpu_custom_call.1} parent=1 // pred_check
      _
    $region27: #{tpu_custom_call.1} parent=1 // pred_check_branch
      %77 = sbr.rel (0) target = $region29
    $region28: #{tpu_custom_call.1} parent=1 // pred_region
      _
    $region29: #{tpu_custom_call.1} parent=1 // pred_fallthru
      _
    // Predicated region
    $region30: #{tpu_custom_call.1} parent=1 // pred_check
      _
    $region31: #{tpu_custom_call.1} parent=1 // pred_check_branch
      %79 = sbr.rel (0) target = $region33
    $region32: #{tpu_custom_call.1} parent=1 // pred_region
      _
    $region33: #{tpu_custom_call.1} parent=1 // pred_fallthru
      _
    // Predicated region
    $region34: #{tpu_custom_call.1} parent=1 // pred_check
      _
    $region35: #{tpu_custom_call.1} parent=1 // pred_check_branch
      %81 = sbr.rel (0) target = $region37
    $region36: #{tpu_custom_call.1} parent=1 // pred_region
      _
    $region37: #{tpu_custom_call.1} parent=1 // pred_fallthru
      _
    // Predicated region
    $region38: #{tpu_custom_call.1} parent=1 // pred_check
      _
    $region39: #{tpu_custom_call.1} parent=1 // pred_check_branch
      %83 = sbr.rel (0) target = $region41
    $region40: #{tpu_custom_call.1} parent=1 // pred_region
      %84 = dma.done [#allocation4], 128
    $region41: #{tpu_custom_call.1} parent=1 // pred_fallthru
      _
    // Predicated region
    $region42: #{tpu_custom_call.1} parent=1 // pred_check
      _
    $region43: #{tpu_custom_call.1} parent=1 // pred_check_branch
      %86 = sbr.rel (0) target = $region45
    $region44: #{tpu_custom_call.1} parent=1 // pred_region
      %87 = dma.done [#allocation7], 128
    $region45: #{tpu_custom_call.1} parent=1 // pred_fallthru
      _
    // Predicated region
    $region46: #{tpu_custom_call.1} parent=1 // pred_check
      _
    $region47: #{tpu_custom_call.1} parent=1 // pred_check_branch
      %89 = sbr.rel (0) target = $region49
    $region48: #{tpu_custom_call.1} parent=1 // pred_region
      %90 = dma.done [#allocation7], 256
    $region49: #{tpu_custom_call.1} parent=1 // pred_fallthru
      _
    // Predicated region
    $region50: #{tpu_custom_call.1} parent=1 // pred_check
      _
    $region51: #{tpu_custom_call.1} parent=1 // pred_check_branch
      %92 = sbr.rel (0) target = $region53
    $region52: #{tpu_custom_call.1} parent=1 // pred_region
      %93 = dma.done [#allocation10], 128
    $region53: #{tpu_custom_call.1} parent=1 // pred_fallthru
      _
    // Predicated region
    $region54: #{tpu_custom_call.1} parent=1 // pred_check
      _
    $region55: #{tpu_custom_call.1} parent=1 // pred_check_branch
      %95 = sbr.rel (0) target = $region57
    $region56: #{tpu_custom_call.1} parent=1 // pred_region
      %96 = dma.done [#allocation10], 512
    $region57: #{tpu_custom_call.1} parent=1 // pred_fallthru
      _
    %v97 = vld [vmem:[#allocation3] sm:$0xff]
    %v98 = vld [vmem:[#allocation8] sm:$0xff]
    %v99 = vld [vmem:[#allocation8 + $0x8] sm:$0xff]
    %v100 = vld [vmem:[#allocation6] sm:$0xff]
    %v101 = vld [vmem:[#allocation9] sm:$0xff]
    %vm102 = vcmask 64512
    %v104 = vsel %vm102, %v100, 0
    %106 = vmatprep.subr.mxu0 0.0
    %107 = vmatpush1.msra.mxu0 0.0
    %108 = vmatprep.subr.mxu0 0.0
    %109 = vmatpush1.msra.mxu0 0.0
    %110 = vmatprep.subr.mxu0 0.0
    %111 = vmatpush1.msra.mxu0 0.0
    %112 = vmatprep.subr.mxu0 0.0
    %113 = vmatpush1.msra.mxu0 0.0
    %114 = vmatprep.subr.mxu0 0.0
    %115 = vmatpush1.msra.mxu0 0.0
    %116 = vmatprep.subr.mxu0 0.0
    %117 = vmatpush1.msra.mxu0 0.0
    %118 = vmatprep.subr.mxu0 0.0
    %119 = vmatpush1.msra.mxu0 0.0
    %120 = vmatprep.subr.mxu0 0.0
    %121 = vmatpush1.msra.mxu0 0.0
    %122 = vmatprep.subr.mxu0 0.0
    %123 = vmatpush1.msra.mxu0 0.0
    %124 = vmatprep.subr.mxu0 0.0
    %125 = vmatpush1.msra.mxu0 0.0
    %126 = vmatprep.subr.mxu0 0.0
    %127 = vmatpush1.msra.mxu0 0.0
    %128 = vmatprep.subr.mxu0 0.0
    %129 = vmatpush1.msra.mxu0 0.0
    %130 = vmatprep.subr.mxu0 0.0
    %131 = vmatpush1.msra.mxu0 0.0
    %132 = vmatprep.subr.mxu0 0.0
    %133 = vmatpush1.msra.mxu0 0.0
    %134 = vmatprep.subr.mxu0 0.0
    %135 = vmatpush1.msra.mxu0 0.0
    %136 = vmatprep.subr.mxu0 0.0
    %137 = vmatpush1.msra.mxu0 %v101
    %138 = vmatprep.subr.mxu0 0.0
    %139 = vmatpush2.msra.mxu0 0.0
    %140 = vmatprep.subr.mxu0 0.0
    %141 = vmatpush2.msra.mxu0 0.0
    %142 = vmatprep.subr.mxu0 0.0
    %143 = vmatpush2.msra.mxu0 0.0
    %144 = vmatprep.subr.mxu0 0.0
    %145 = vmatpush2.msra.mxu0 0.0
    %146 = vmatprep.subr.mxu0 0.0
    %147 = vmatpush2.msra.mxu0 0.0
    %148 = vmatprep.subr.mxu0 0.0
    %149 = vmatpush2.msra.mxu0 0.0
    %150 = vmatprep.subr.mxu0 0.0
    %151 = vmatpush2.msra.mxu0 0.0
    %152 = vmatprep.subr.mxu0 0.0
    %153 = vmatpush2.msra.mxu0 0.0
    %154 = vmatprep.subr.mxu0 0.0
    %155 = vmatpush2.msra.mxu0 0.0
    %156 = vmatprep.subr.mxu0 0.0
    %157 = vmatpush2.msra.mxu0 0.0
    %158 = vmatprep.subr.mxu0 0.0
    %159 = vmatpush2.msra.mxu0 0.0
    %160 = vmatprep.subr.mxu0 0.0
    %161 = vmatpush2.msra.mxu0 0.0
    %162 = vmatprep.subr.mxu0 0.0
    %163 = vmatpush2.msra.mxu0 0.0
    %164 = vmatprep.subr.mxu0 0.0
    %165 = vmatpush2.msra.mxu0 0.0
    %166 = vmatprep.subr.mxu0 0.0
    %167 = vmatpush2.msra.mxu0 0.0
    %168 = vmatprep.subr.mxu0 0.0
    %169 = vmatpush2.msra.mxu0 0.0
    %170 = vmatprep.mubr.f32.mxu0 0.0
    %171 = vmatmul.mubr.f32.gmra.mxu0 %v104
    %v172 = vpop.f32.mrf.mxu0
    %v173 = vadd.f32 0.0, %v172
    %v174 = vpop.f32.mrf.mxu0
    %175 = vdwg.mxu0
    %vm176 = vcmask 130048
    %v178 = vsel %vm176, %v97, 0
    %180 = vmatprep.subr.mxu0 0.0
    %181 = vmatpush1.msra.mxu0 0.0
    %182 = vmatprep.subr.mxu0 0.0
    %183 = vmatpush1.msra.mxu0 0.0
    %184 = vmatprep.subr.mxu0 0.0
    %185 = vmatpush1.msra.mxu0 0.0
    %186 = vmatprep.subr.mxu0 0.0
    %187 = vmatpush1.msra.mxu0 0.0
    %188 = vmatprep.subr.mxu0 0.0
    %189 = vmatpush1.msra.mxu0 0.0
    %190 = vmatprep.subr.mxu0 0.0
    %191 = vmatpush1.msra.mxu0 0.0
    %192 = vmatprep.subr.mxu0 0.0
    %193 = vmatpush1.msra.mxu0 0.0
    %194 = vmatprep.subr.mxu0 0.0
    %195 = vmatpush1.msra.mxu0 0.0
    %196 = vmatprep.subr.mxu0 0.0
    %197 = vmatpush1.msra.mxu0 0.0
    %198 = vmatprep.subr.mxu0 0.0
    %199 = vmatpush1.msra.mxu0 0.0
    %200 = vmatprep.subr.mxu0 0.0
    %201 = vmatpush1.msra.mxu0 0.0
    %202 = vmatprep.subr.mxu0 0.0
    %203 = vmatpush1.msra.mxu0 0.0
    %204 = vmatprep.subr.mxu0 0.0
    %205 = vmatpush1.msra.mxu0 0.0
    %206 = vmatprep.subr.mxu0 0.0
    %207 = vmatpush1.msra.mxu0 0.0
    %208 = vmatprep.subr.mxu0 0.0
    %209 = vmatpush1.msra.mxu0 %v99
    %210 = vmatprep.subr.mxu0 0.0
    %211 = vmatpush1.msra.mxu0 %v98
    %212 = vmatprep.subr.mxu0 0.0
    %213 = vmatpush2.msra.mxu0 0.0
    %214 = vmatprep.subr.mxu0 0.0
    %215 = vmatpush2.msra.mxu0 0.0
    %216 = vmatprep.subr.mxu0 0.0
    %217 = vmatpush2.msra.mxu0 0.0
    %218 = vmatprep.subr.mxu0 0.0
    %219 = vmatpush2.msra.mxu0 0.0
    %220 = vmatprep.subr.mxu0 0.0
    %221 = vmatpush2.msra.mxu0 0.0
    %222 = vmatprep.subr.mxu0 0.0
    %223 = vmatpush2.msra.mxu0 0.0
    %224 = vmatprep.subr.mxu0 0.0
    %225 = vmatpush2.msra.mxu0 0.0
    %226 = vmatprep.subr.mxu0 0.0
    %227 = vmatpush2.msra.mxu0 0.0
    %228 = vmatprep.subr.mxu0 0.0
    %229 = vmatpush2.msra.mxu0 0.0
    %230 = vmatprep.subr.mxu0 0.0
    %231 = vmatpush2.msra.mxu0 0.0
    %232 = vmatprep.subr.mxu0 0.0
    %233 = vmatpush2.msra.mxu0 0.0
    %234 = vmatprep.subr.mxu0 0.0
    %235 = vmatpush2.msra.mxu0 0.0
    %236 = vmatprep.subr.mxu0 0.0
    %237 = vmatpush2.msra.mxu0 0.0
    %238 = vmatprep.subr.mxu0 0.0
    %239 = vmatpush2.msra.mxu0 0.0
    %240 = vmatprep.subr.mxu0 0.0
    %241 = vmatpush2.msra.mxu0 0.0
    %242 = vmatprep.subr.mxu0 0.0
    %243 = vmatpush2.msra.mxu0 0.0
    %244 = vmatprep.mubr.f32.mxu0 0.0
    %245 = vmatmul.mubr.f32.gmra.mxu0 %v178
    %v246 = vpop.f32.mrf.mxu0
    %v247 = vadd.f32 %v173, %v246
    %v248 = vpop.f32.mrf.mxu0
    %249 = vdwg.mxu0
    %v250 = vld [vmem:[%s4] sm:$0x1]
    %v252 = vlaneseq
    %v253 = vshrl.u32 %v252, 7
    %v254 = vsub.s32 0, %v253
    %v255 = vrot.slane %v250, %v254
    %v257 = vadd.f32 %v247, %v255
    %v258 = vmax.f32 %v257, 0.0
    %v259 = vld [vmem:[#allocation11] sm:$0xff]
    %v260 = vld [vmem:[#allocation11 + $0x8] sm:$0xff]
    %v261 = vld [vmem:[#allocation11 + $0x10] sm:$0xff]
    %v262 = vld [vmem:[#allocation11 + $0x18] sm:$0xff]
    %v263 = vld [vmem:[%s6] sm:$0x1]
    %v265 = vlaneseq
    %v266 = vshrl.u32 %v265, 7
    %v267 = vsub.s32 0, %v266
    %v268 = vrot.slane %v263, %v267
    %vm270 = vcmask 261120
    %v272 = vsel %vm270, %v258, 0
    %274 = vmatprep.subr.mxu0 0.0
    %275 = vmatpush1.msra.mxu0 0.0
    %276 = vmatprep.subr.mxu0 0.0
    %277 = vmatpush1.msra.mxu0 0.0
    %278 = vmatprep.subr.mxu0 0.0
    %279 = vmatpush1.msra.mxu0 0.0
    %280 = vmatprep.subr.mxu0 0.0
    %281 = vmatpush1.msra.mxu0 0.0
    %282 = vmatprep.subr.mxu0 0.0
    %283 = vmatpush1.msra.mxu0 0.0
    %284 = vmatprep.subr.mxu0 0.0
    %285 = vmatpush1.msra.mxu0 0.0
    %286 = vmatprep.subr.mxu0 0.0
    %287 = vmatpush1.msra.mxu0 0.0
    %288 = vmatprep.subr.mxu0 0.0
    %289 = vmatpush1.msra.mxu0 0.0
    %290 = vmatprep.subr.mxu0 0.0
    %291 = vmatpush1.msra.mxu0 0.0
    %292 = vmatprep.subr.mxu0 0.0
    %293 = vmatpush1.msra.mxu0 0.0
    %294 = vmatprep.subr.mxu0 0.0
    %295 = vmatpush1.msra.mxu0 0.0
    %296 = vmatprep.subr.mxu0 0.0
    %297 = vmatpush1.msra.mxu0 0.0
    %298 = vmatprep.subr.mxu0 0.0
    %299 = vmatpush1.msra.mxu0 %v262
    %300 = vmatprep.subr.mxu0 0.0
    %301 = vmatpush1.msra.mxu0 %v261
    %302 = vmatprep.subr.mxu0 0.0
    %303 = vmatpush1.msra.mxu0 %v260
    %304 = vmatprep.subr.mxu0 0.0
    %305 = vmatpush1.msra.mxu0 %v259
    %306 = vmatprep.subr.mxu0 0.0
    %307 = vmatpush2.msra.mxu0 0.0
    %308 = vmatprep.subr.mxu0 0.0
    %309 = vmatpush2.msra.mxu0 0.0
    %310 = vmatprep.subr.mxu0 0.0
    %311 = vmatpush2.msra.mxu0 0.0
    %312 = vmatprep.subr.mxu0 0.0
    %313 = vmatpush2.msra.mxu0 0.0
    %314 = vmatprep.subr.mxu0 0.0
    %315 = vmatpush2.msra.mxu0 0.0
    %316 = vmatprep.subr.mxu0 0.0
    %317 = vmatpush2.msra.mxu0 0.0
    %318 = vmatprep.subr.mxu0 0.0
    %319 = vmatpush2.msra.mxu0 0.0
    %320 = vmatprep.subr.mxu0 0.0
    %321 = vmatpush2.msra.mxu0 0.0
    %322 = vmatprep.subr.mxu0 0.0
    %323 = vmatpush2.msra.mxu0 0.0
    %324 = vmatprep.subr.mxu0 0.0
    %325 = vmatpush2.msra.mxu0 0.0
    %326 = vmatprep.subr.mxu0 0.0
    %327 = vmatpush2.msra.mxu0 0.0
    %328 = vmatprep.subr.mxu0 0.0
    %329 = vmatpush2.msra.mxu0 0.0
    %330 = vmatprep.subr.mxu0 0.0
    %331 = vmatpush2.msra.mxu0 0.0
    %332 = vmatprep.subr.mxu0 0.0
    %333 = vmatpush2.msra.mxu0 0.0
    %334 = vmatprep.subr.mxu0 0.0
    %335 = vmatpush2.msra.mxu0 0.0
    %336 = vmatprep.subr.mxu0 0.0
    %337 = vmatpush2.msra.mxu0 0.0
    %338 = vmatprep.mubr.f32.mxu0 0.0
    %339 = vmatmul.mubr.f32.gmra.mxu0 %v272
    %v340 = vpop.f32.mrf.mxu0
    %v341 = vadd.f32 %v268, %v340
    %v342 = vpop.f32.mrf.mxu0
    %343 = vdwg.mxu0
    %v344 = vmax.f32 %v341, 0.0
    %v345 = vld [vmem:[%s7] sm:$0xff]
    %v347 = vsel %vm270, %v345, 0
    %v350 = vsel %vm270, %v344, 0
    %352 = vmatprep.subr.mxu0 0.0
    %353 = vmatpush1.xpose.msra.mxu0 0.0
    %354 = vmatprep.subr.mxu0 0.0
    %355 = vmatpush1.xpose.msra.mxu0 0.0
    %356 = vmatprep.subr.mxu0 0.0
    %357 = vmatpush1.xpose.msra.mxu0 0.0
    %358 = vmatprep.subr.mxu0 0.0
    %359 = vmatpush1.xpose.msra.mxu0 0.0
    %360 = vmatprep.subr.mxu0 0.0
    %361 = vmatpush1.xpose.msra.mxu0 0.0
    %362 = vmatprep.subr.mxu0 0.0
    %363 = vmatpush1.xpose.msra.mxu0 0.0
    %364 = vmatprep.subr.mxu0 0.0
    %365 = vmatpush1.xpose.msra.mxu0 0.0
    %366 = vmatprep.subr.mxu0 0.0
    %367 = vmatpush1.xpose.msra.mxu0 0.0
    %368 = vmatprep.subr.mxu0 0.0
    %369 = vmatpush1.xpose.msra.mxu0 0.0
    %370 = vmatprep.subr.mxu0 0.0
    %371 = vmatpush1.xpose.msra.mxu0 0.0
    %372 = vmatprep.subr.mxu0 0.0
    %373 = vmatpush1.xpose.msra.mxu0 0.0
    %374 = vmatprep.subr.mxu0 0.0
    %375 = vmatpush1.xpose.msra.mxu0 0.0
    %376 = vmatprep.subr.mxu0 0.0
    %377 = vmatpush1.xpose.msra.mxu0 0.0
    %378 = vmatprep.subr.mxu0 0.0
    %379 = vmatpush1.xpose.msra.mxu0 0.0
    %380 = vmatprep.subr.mxu0 0.0
    %381 = vmatpush1.xpose.msra.mxu0 0.0
    %382 = vmatprep.subr.mxu0 0.0
    %383 = vmatpush1.xpose.msra.mxu0 %v350
    %384 = vmatprep.subr.mxu0 0.0
    %385 = vmatpush2.xpose.msra.mxu0 0.0
    %386 = vmatprep.subr.mxu0 0.0
    %387 = vmatpush2.xpose.msra.mxu0 0.0
    %388 = vmatprep.subr.mxu0 0.0
    %389 = vmatpush2.xpose.msra.mxu0 0.0
    %390 = vmatprep.subr.mxu0 0.0
    %391 = vmatpush2.xpose.msra.mxu0 0.0
    %392 = vmatprep.subr.mxu0 0.0
    %393 = vmatpush2.xpose.msra.mxu0 0.0
    %394 = vmatprep.subr.mxu0 0.0
    %395 = vmatpush2.xpose.msra.mxu0 0.0
    %396 = vmatprep.subr.mxu0 0.0
    %397 = vmatpush2.xpose.msra.mxu0 0.0
    %398 = vmatprep.subr.mxu0 0.0
    %399 = vmatpush2.xpose.msra.mxu0 0.0
    %400 = vmatprep.subr.mxu0 0.0
    %401 = vmatpush2.xpose.msra.mxu0 0.0
    %402 = vmatprep.subr.mxu0 0.0
    %403 = vmatpush2.xpose.msra.mxu0 0.0
    %404 = vmatprep.subr.mxu0 0.0
    %405 = vmatpush2.xpose.msra.mxu0 0.0
    %406 = vmatprep.subr.mxu0 0.0
    %407 = vmatpush2.xpose.msra.mxu0 0.0
    %408 = vmatprep.subr.mxu0 0.0
    %409 = vmatpush2.xpose.msra.mxu0 0.0
    %410 = vmatprep.subr.mxu0 0.0
    %411 = vmatpush2.xpose.msra.mxu0 0.0
    %412 = vmatprep.subr.mxu0 0.0
    %413 = vmatpush2.xpose.msra.mxu0 0.0
    %414 = vmatprep.subr.mxu0 0.0
    %415 = vmatpush2.xpose.msra.mxu0 0.0
    %416 = vmatprep.mubr.f32.mxu0 0.0
    %417 = vmatmul.mubr.f32.gmra.mxu0 %v347
    %v418 = vpop.f32.mrf.mxu0
    %v419 = vadd.f32 0.0, %v418
    %v420 = vpop.f32.mrf.mxu0
    %421 = vdwg.mxu0
    %v422 = vld [vmem:[#allocation2] sm:$0x1]
    %424 = vset.pattern.permute.xlu0 0
    %425 = vperm.xlu0 %424, %v422
    %v426 = vpop.permute.xlu0 %425
    %v428 = vlaneseq
    %v429 = vshrl.u32 %v428, 7
    %v430 = vsub.s32 0, %v429
    %v431 = vrot.slane %v426, %v430
    %v432 = vadd.f32 %v419, %v431
    %vm433 = vcmask 57344
    %434 = vst.msk [vmem:[#allocation12] sm:$0x1] %vm433, %v432
    // Predicated region
    $region58: #{tpu_custom_call.1} parent=1 // pred_check
      _
    $region59: #{tpu_custom_call.1} parent=1 // pred_check_branch
      %436 = sbr.rel (0) target = $region61
    $region60: #{tpu_custom_call.1} parent=1 // pred_region
      %s438 = ssub.s32 16, 16
      %439 = vsyncadd [#allocation5], %s438
      %s441 = sshll.u32 [#allocation12], 4
      %s442 = int_to_ptr.vmem [resolvable:$true] %s441
      %444 = dma.vmem_to_hbm [thread:$0]  %s442, 16, %s9, [#allocation5]
    $region61: #{tpu_custom_call.1} parent=1 // pred_fallthru
      _
    // Predicated region
    $region62: #{tpu_custom_call.1} parent=1 // pred_check
      _
    $region63: #{tpu_custom_call.1} parent=1 // pred_check_branch
      %446 = sbr.rel (0) target = $region65
    $region64: #{tpu_custom_call.1} parent=1 // pred_region
      %447 = dma.done [#allocation5], 16
    $region65: #{tpu_custom_call.1} parent=1 // pred_fallthru
      _
    %448 = vsyncpa [#allocation4], 1
    %449 = vsyncpa [#allocation7], 1
    %450 = vsyncpa [#allocation10], 1
    %451 = vsyncpa [#allocation5], 1

</llo_original>
